<compile_context>
chip_gen: v6e
topology: v6e:2x2x1
jax: 0.10.0
libtpu: 0.0.40
codegen_flags: <defaults>
</compile_context>

<pallas_src>
import jax
import jax.numpy as jnp
from jax.experimental import pallas as pl
from jax.experimental.pallas import tpu as pltpu


def _copy_kernel(x_ref, o_ref):
    # Identity copy of a lane-dense tile; no reshape inside the kernel.
    o_ref[...] = x_ref[...]


def _pick_lane_width(n):
    """Largest lane-dense (multiple-of-128) width that divides n."""
    for c in (4096, 2048, 1024, 512, 256, 128):
        if n % c == 0:
            return c
    # Fallback for odd sizes: single full-width row (legal: block == full dim).
    return n


def unsqueeze(x, dim):
    """Pallas equivalent of torch.Tensor.unsqueeze(dim)."""
    ndim = x.ndim
    # torch semantics: valid dims are [-(ndim+1), ndim]
    if dim < 0:
        dim = dim + ndim + 1
    assert 0 <= dim <= ndim, f"dim {dim} out of range for ndim {ndim}"

    out_shape = x.shape[:dim] + (1,) + x.shape[dim:]
    n = x.size
    if n == 0:
        return jnp.reshape(x, out_shape)

    itemsize = jnp.dtype(x.dtype).itemsize

    # Flatten to a lane-dense 2-D view (free metadata reshape in the wrapper).
    C = _pick_lane_width(n)
    R = n // C
    x2d = jnp.reshape(x, (R, C))

    # Row tile sized to ~2 MiB: safe on v5e's 16 MiB scoped VMEM default and
    # well under v7x's 64 MiB physical with 2x double-buffered in+out tiles.
    max_tile_bytes = 2 * 1024 * 1024
    rows_per_tile = max(1, max_tile_bytes // (C * itemsize))
    if rows_per_tile >= R:
        tr = R                              # full dim -> always legal
    else:
        tr = max(8, (rows_per_tile // 8) * 8)  # keep sublane-aligned tiles
    grid = (pl.cdiv(R, tr),)

    tile_bytes = tr * C * itemsize
    # 2 buffers x (in tile + out tile) + headroom.
    vmem_limit = int(min(128 * 1024 * 1024,
                         max(4 * tile_bytes + (2 << 20), 8 << 20)))

    y2d = pl.pallas_call(
        _copy_kernel,
        out_shape=jax.ShapeDtypeStruct((R, C), x.dtype),
        grid=grid,
        in_specs=[pl.BlockSpec((tr, C), lambda i: (i, 0))],
        out_specs=pl.BlockSpec((tr, C), lambda i: (i, 0)),
        compiler_params=pltpu.CompilerParams(
            dimension_semantics=("parallel",),
            vmem_limit_bytes=vmem_limit,
        ),
        cost_estimate=pl.CostEstimate(
            flops=0,
            transcendentals=0,
            bytes_accessed=2 * n * itemsize,
        ),
    )(x2d)

    # Insert the unit axis in the wrapper (free), never inside the kernel.
    return jnp.reshape(y2d, out_shape)


if __name__ == "__main__":
    key = jax.random.PRNGKey(0)
    # Small NCHW-style input consistent with the module usage.
    x = jax.random.normal(key, (2, 4, 16, 16), dtype=jnp.float32)

    # dim = 1 (as torch's x.unsqueeze(1))
    y = jax.block_until_ready(unsqueeze(x, 1))
    y_ref = jnp.expand_dims(x, 1)
    assert y.shape == (2, 1, 4, 16, 16), y.shape
    assert y.dtype == x.dtype
    assert bool(jnp.array_equal(y, y_ref))

    # Negative dim, like torch allows (trailing-dim unsqueeze: kernel still
    # sees lane-dense blocks because the unit axis is added in the wrapper).
    y2 = jax.block_until_ready(unsqueeze(x, -1))
    assert y2.shape == (2, 4, 16, 16, 1), y2.shape
    assert bool(jnp.array_equal(y2, jnp.expand_dims(x, -1)))

    # Leading-dim unsqueeze.
    y3 = jax.block_until_ready(unsqueeze(x, 0))
    assert y3.shape == (1, 2, 4, 16, 16), y3.shape
    assert bool(jnp.array_equal(y3, jnp.expand_dims(x, 0)))

    print("KERNEL_OK")
</pallas_src>

<mosaic_0001>
module attributes {stable_mosaic.version = 11 : i64} {
  func.func @_copy_kernel(%arg0: i32, %arg1: memref<1x2048xf32, #tpu.memory_space<vmem>>, %arg2: memref<1x2048xf32, #tpu.memory_space<vmem>>) attributes {dimension_semantics = [#tpu.dimension_semantics<parallel>], iteration_bounds = array<i64: 1>, scalar_prefetch = 0 : i64, scratch_operands = 0 : i64, tpu.core_type = #tpu.core_type<tc>, window_params = [{transform_indices = @transform_0, window_bounds = array<i64: 1, 2048>}, {transform_indices = @transform_1, window_bounds = array<i64: 1, 2048>}]} {
    %c0 = arith.constant 0 : index
    %c0_0 = arith.constant 0 : index
    %0 = vector.load %arg1[%c0, %c0_0] : memref<1x2048xf32, #tpu.memory_space<vmem>>, vector<1x2048xf32>
    %c0_1 = arith.constant 0 : index
    %c0_2 = arith.constant 0 : index
    %1 = vector.load %arg2[%c0_1, %c0_2] : memref<1x2048xf32, #tpu.memory_space<vmem>>, vector<1x2048xf32>
    tpu.vector_store %arg2[%c0_1, %c0_2], %0 {strides = array<i32>} : memref<1x2048xf32, #tpu.memory_space<vmem>>, vector<1x2048xf32>,
    return
  }
  func.func @transform_0(%arg0: i32) -> (i32, i32) {
    %c0_i32 = arith.constant 0 : i32
    %c0_i32_0 = arith.constant 0 : i32
    return %arg0, %c0_i32 : i32, i32
  }
  func.func @transform_1(%arg0: i32) -> (i32, i32) {
    %c0_i32 = arith.constant 0 : i32
    %c0_i32_0 = arith.constant 0 : i32
    return %arg0, %c0_i32 : i32, i32
  }
}

</mosaic_0001>

<llo_original>
// kernel: tpu_custom_call.1
$region0: #{tpu_custom_call.1}
  #allocation0 [shape = 'u32[]', space=smem, size = 0x4, offset = 0x4, fixed_abs, tag = 'smem constant byte address 0x4 - core index']
  #allocation1 [shape = 'u32[144,128]{1,0:T(1,128)}', space=vmem, size = 0x12000, scoped, tag = 'internal scratch']
  %s0 = inlined_call_operand.hbm [shape: f32[1,2048], index: 0, kind: input, shape index: {}]
  %s1 = inlined_call_operand.hbm [shape: f32[1,2048], index: 1, kind: output, shape index: {}]
  %s2 = sld [smem:[#allocation0]]
  $region18: #{tpu_custom_call.1} parent=0
    _
  %s4 = ssub.s32 1, %s2
  %s5 = scalar_select 0, %s4, %s2
  $region1: #{tpu_custom_call.1} parent=0
    #allocation2 [shape = 'u8[8192]{0}', space=vmem, size = 0x2000, scoped, tag = 'input window, operand 0, single buffered']
    #allocation3 [shape = 's32[1]{0}', space=sflag, size = 0x4, scoped, tag = 'scoped memory for tpu_custom_call.1']
    #allocation4 [shape = 's32[1]{0}', space=sflag, size = 0x4, scoped, tag = 'scoped memory for tpu_custom_call.1']
    #allocation5 [shape = 'u8[8192]{0}', space=vmem, size = 0x2000, scoped, tag = 'output window, operand 0, single buffered']
    %6 = vsyncpa [#allocation3], 0
    %7 = vsyncpa [#allocation4], 0
    // Predicated region
    $region2: #{tpu_custom_call.1} parent=1 // pred_check
      _
    $region3: #{tpu_custom_call.1} parent=1 // pred_check_branch
      %9 = sbr.rel (0) target = $region5
    $region4: #{tpu_custom_call.1} parent=1 // pred_region
      %s11 = ssub.s32 256, 256
      %12 = vsyncadd [#allocation3], %s11
      %s14 = sshll.u32 [#allocation2], 4
      %s15 = int_to_ptr.vmem [resolvable:$true] %s14
      %17 = dma.hbm_to_vmem [thread:$0]  %s0, 256, %s15, [#allocation3]
    $region5: #{tpu_custom_call.1} parent=1 // pred_fallthru
      _
    // Predicated region
    $region6: #{tpu_custom_call.1} parent=1 // pred_check
      _
    $region7: #{tpu_custom_call.1} parent=1 // pred_check_branch
      %19 = sbr.rel (0) target = $region9
    $region8: #{tpu_custom_call.1} parent=1 // pred_region
      %20 = dma.done [#allocation3], 256
    $region9: #{tpu_custom_call.1} parent=1 // pred_fallthru
      _
    %v21 = vld [vmem:[#allocation2] sm:$0xff]
    %v22 = vld [vmem:[#allocation2 + $0x8] sm:$0xff]
    %23 = vst [vmem:[#allocation5] sm:$0xff] %v21
    %24 = vst [vmem:[#allocation5 + $0x8] sm:$0xff] %v22
    // Predicated region
    $region10: #{tpu_custom_call.1} parent=1 // pred_check
      _
    $region11: #{tpu_custom_call.1} parent=1 // pred_check_branch
      %26 = sbr.rel (0) target = $region13
    $region12: #{tpu_custom_call.1} parent=1 // pred_region
      %s28 = ssub.s32 256, 256
      %29 = vsyncadd [#allocation4], %s28
      %s31 = sshll.u32 [#allocation5], 4
      %s32 = int_to_ptr.vmem [resolvable:$true] %s31
      %34 = dma.vmem_to_hbm [thread:$0]  %s32, 256, %s1, [#allocation4]
    $region13: #{tpu_custom_call.1} parent=1 // pred_fallthru
      _
    // Predicated region
    $region14: #{tpu_custom_call.1} parent=1 // pred_check
      _
    $region15: #{tpu_custom_call.1} parent=1 // pred_check_branch
      %36 = sbr.rel (0) target = $region17
    $region16: #{tpu_custom_call.1} parent=1 // pred_region
      %37 = dma.done [#allocation4], 256
    $region17: #{tpu_custom_call.1} parent=1 // pred_fallthru
      _
    %38 = vsyncpa [#allocation3], 1
    %39 = vsyncpa [#allocation4], 1

</llo_original>
